<compile_context>
chip_gen: v6e
topology: v6e:2x2x1
jax: 0.10.0
libtpu: 0.0.40
codegen_flags: <defaults>
</compile_context>

<pallas_src>
import jax
import jax.numpy as jnp
from jax.experimental import pallas as pl
from jax.experimental.pallas import tpu as pltpu


def _hypernet_kernel(emb_ref,      # (N, E)   gathered embeddings
                     fc1_wT_ref,   # (E, T)
                     fc1_b_ref,    # (1, T)
                     v1_ref,       # (D, 1)   wd_w @ cn0_w
                     c_ref,        # (D, 1)   wd_w @ cn0_b + wd_b
                     bd_wT_ref,    # (E, Dp)  lane-padded biases_decoder weight
                     bd_b_ref,     # (1, Dp)
                     w_out_ref,    # (N, D, T)
                     b_out_ref):   # (N, Dp)
    emb = emb_ref[...]                                            # (N, E)

    # fc1 + ReLU for all conditions at once: (N,E)@(E,T) on the MXU.
    wb = jnp.dot(emb, fc1_wT_ref[...], preferred_element_type=jnp.float32)
    wb = jnp.maximum(wb + fc1_b_ref[...], 0.0)                    # (N, T)

    # Fused cn0 + weights_decoder: per condition an outer product plus a
    # constant column (pure VPU broadcast).  Unrolled over the small static
    # batch so every op stays rank-2 with (D,1)*(1,T) broadcasting.
    v1 = v1_ref[...]                                              # (D, 1)
    c = c_ref[...]                                                # (D, 1)
    n_conds = w_out_ref.shape[0]
    for n in range(n_conds):
        w_n = v1 * wb[n:n + 1, :] + c                             # (D, T)
        w_out_ref[n, :, :] = w_n.astype(w_out_ref.dtype)

    # biases_decoder for all conditions: (N,E)@(E,Dp) on the MXU (lane-dense).
    b = jnp.dot(emb, bd_wT_ref[...], preferred_element_type=jnp.float32)
    b_out_ref[...] = (b + bd_b_ref[...]).astype(b_out_ref.dtype)


def conv_hypernet_pallas(params, cond_ids, D_img):
    """Returns (weight, bias) stacked over conditions:
       weight: (num_conds, D_img, T) float32
       bias:   (num_conds, D_img)    float32
    """
    emb_table = params["cond_embs"]                     # (num_cond_embs, E)
    E = emb_table.shape[1]
    fc1_wT = params["fc1_w"].T                          # (E, T)
    fc1_b = params["fc1_b"][None, :]                    # (1, T)
    T = fc1_b.shape[1]

    idx = params["decoder_lookup"][D_img]
    wd_w = params["wd_w"][idx][:, :, 0]                 # (D, I)
    wd_b = params["wd_b"][idx]                          # (D,)
    D = wd_w.shape[0]

    cn0_w = params["cn0_w"][:, 0, 0]                    # (I,)
    cn0_b = params["cn0_b"]                             # (I,)

    # Algebraic fusion of cn0 + weights_decoder (both are kernel-size-1 convs
    # of a rank-1 input) -- precomputed once in the wrapper.
    v1 = (wd_w @ cn0_w)[:, None]                        # (D, 1)
    c = (wd_w @ cn0_b + wd_b)[:, None]                  # (D, 1)

    # biases_decoder, lane-padded to a multiple of 128 for dense stores.
    bd_w = params["bd_w"][idx]                          # (D, E)
    bd_b = params["bd_b"][idx]                          # (D,)
    Dp = ((D + 127) // 128) * 128
    pad = Dp - D
    bd_wT = jnp.pad(bd_w.T.astype(jnp.float32), ((0, 0), (0, pad)))   # (E, Dp)
    bd_bp = jnp.pad(bd_b.astype(jnp.float32), (0, pad))[None, :]      # (1, Dp)

    cond_ids = jnp.asarray(cond_ids, dtype=jnp.int32)
    N = cond_ids.shape[0]
    emb = emb_table[cond_ids]                           # (N, E) host-side gather

    flops = int(2 * N * E * T + 2 * N * E * Dp + 2 * N * D * T)
    bytes_accessed = int(4 * (N * E + E * T + T + 2 * D + E * Dp + Dp
                              + N * D * T + N * Dp))

    weight, bias_p = pl.pallas_call(
        _hypernet_kernel,
        grid=(1,),
        in_specs=[
            pl.BlockSpec((N, E), lambda i: (0, 0)),
            pl.BlockSpec((E, T), lambda i: (0, 0)),
            pl.BlockSpec((1, T), lambda i: (0, 0)),
            pl.BlockSpec((D, 1), lambda i: (0, 0)),
            pl.BlockSpec((D, 1), lambda i: (0, 0)),
            pl.BlockSpec((E, Dp), lambda i: (0, 0)),
            pl.BlockSpec((1, Dp), lambda i: (0, 0)),
        ],
        out_specs=[
            pl.BlockSpec((N, D, T), lambda i: (0, 0, 0)),
            pl.BlockSpec((N, Dp), lambda i: (0, 0)),
        ],
        out_shape=(
            jax.ShapeDtypeStruct((N, D, T), jnp.float32),
            jax.ShapeDtypeStruct((N, Dp), jnp.float32),
        ),
        compiler_params=pltpu.CompilerParams(
            dimension_semantics=("parallel",)),
        cost_estimate=pl.CostEstimate(
            flops=flops, transcendentals=0, bytes_accessed=bytes_accessed),
    )(emb, fc1_wT, fc1_b, v1, c, bd_wT, bd_bp)

    return weight, bias_p[:, :D]


def conv_hypernet_forward(params, cond_id, D_img):
    """Mirrors ConvHyperNet.forward semantics."""
    if not isinstance(cond_id, (list, tuple)):
        cond_id = [cond_id]
    weight, bias = conv_hypernet_pallas(params, list(cond_id), D_img)
    num_conds = len(cond_id)
    if num_conds == 1:
        return [weight[0], bias[0]]
    return [[weight[i], bias[i]] for i in range(num_conds)]


def init_params(key, dims, num_cond_embs, cond_emb_dim):
    """Deterministic init mimicking PyTorch defaults (shapes match nn modules)."""
    T = dims["text"]
    I = dims["intermediate"]
    keys = jax.random.split(key, 8 + 4 * dims["num_embed_dims"])
    k = iter(keys)

    def unif(kk, shape, fan_in):
        bound = 1.0 / jnp.sqrt(jnp.float32(fan_in))
        return jax.random.uniform(kk, shape, jnp.float32, -bound, bound)

    params = {
        "cond_embs": jax.random.normal(next(k), (num_cond_embs, cond_emb_dim),
                                       jnp.float32),
        # nn.Linear(cond_emb_dim, T): weight (T, E), bias (T,)
        "fc1_w": unif(next(k), (T, cond_emb_dim), cond_emb_dim),
        "fc1_b": unif(next(k), (T,), cond_emb_dim),
        # nn.Conv1d(1, I, 1): weight (I, 1, 1), bias (I,)
        "cn0_w": unif(next(k), (I, 1, 1), 1),
        "cn0_b": unif(next(k), (I,), 1),
        "wd_w": [], "wd_b": [], "bd_w": [], "bd_b": [],
        "decoder_lookup": {dims["image"][i]: i
                           for i in range(dims["num_embed_dims"])},
    }
    for i in range(dims["num_embed_dims"]):
        Di = dims["image"][i]
        # nn.Conv1d(I, Di, 1): weight (Di, I, 1), bias (Di,)
        params["wd_w"].append(unif(next(k), (Di, I, 1), I))
        params["wd_b"].append(unif(next(k), (Di,), I))
        # nn.Linear(cond_emb_dim, Di): weight (Di, E), bias (Di,)
        params["bd_w"].append(unif(next(k), (Di, cond_emb_dim), cond_emb_dim))
        params["bd_b"].append(unif(next(k), (Di,), cond_emb_dim))
    return params


def reference_forward(params, cond_id, D_img):
    """Pure-JAX reference (mirrors the PyTorch math exactly)."""
    if not isinstance(cond_id, (list, tuple)):
        cond_id = [cond_id]
    idx = params["decoder_lookup"][D_img]
    outs = []
    for c in cond_id:
        emb = params["cond_embs"][c]                                    # (E,)
        wb = jnp.maximum(params["fc1_w"] @ emb + params["fc1_b"], 0.0)  # (T,)
        base = params["cn0_w"][:, 0, 0][:, None] * wb[None, :] \
            + params["cn0_b"][:, None]                                  # (I, T)
        w = params["wd_w"][idx][:, :, 0] @ base \
            + params["wd_b"][idx][:, None]                              # (D, T)
        b = params["bd_w"][idx] @ emb + params["bd_b"][idx]             # (D,)
        outs.append([w, b])
    return outs[0] if len(outs) == 1 else outs


if __name__ == "__main__":
    dims = {
        "text": 128,
        "intermediate": 16,
        "image": [64, 128],
        "num_embed_dims": 2,
    }
    num_cond_embs = 8
    cond_emb_dim = 32
    D_img = 64  # selects weights_decoder[0] / biases_decoder[0]

    params = init_params(jax.random.PRNGKey(0), dims, num_cond_embs, cond_emb_dim)

    # multi-condition call
    cond_id = [1, 3, 5]
    out = conv_hypernet_forward(params, cond_id, D_img)
    jax.block_until_ready(out)

    ref = reference_forward(params, cond_id, D_img)
    for (w_k, b_k), (w_r, b_r) in zip(out, ref):
        assert w_k.shape == (D_img, dims["text"]) and b_k.shape == (D_img,)
        assert jnp.allclose(w_k, w_r, atol=1e-5, rtol=1e-5)
        assert jnp.allclose(b_k, b_r, atol=1e-5, rtol=1e-5)

    # single-condition call (returns [weight, bias], like the PyTorch module)
    w_single, b_single = conv_hypernet_forward(params, 2, D_img)
    jax.block_until_ready((w_single, b_single))
    w_ref, b_ref = reference_forward(params, 2, D_img)
    assert jnp.allclose(w_single, w_ref, atol=1e-5, rtol=1e-5)
    assert jnp.allclose(b_single, b_ref, atol=1e-5, rtol=1e-5)

    # other decoder head (D_img = 128), exercises the no-padding bias path
    out2 = conv_hypernet_forward(params, [0, 7], 128)
    jax.block_until_ready(out2)
    ref2 = reference_forward(params, [0, 7], 128)
    for (w_k, b_k), (w_r, b_r) in zip(out2, ref2):
        assert jnp.allclose(w_k, w_r, atol=1e-5, rtol=1e-5)
        assert jnp.allclose(b_k, b_r, atol=1e-5, rtol=1e-5)

    print("KERNEL_OK")
</pallas_src>

<mosaic_0001>
module attributes {stable_mosaic.version = 11 : i64} {
  func.func @_hypernet_kernel(%arg0: i32, %arg1: memref<3x32xf32, #tpu.memory_space<vmem>>, %arg2: memref<32x128xf32, #tpu.memory_space<vmem>>, %arg3: memref<1x128xf32, #tpu.memory_space<vmem>>, %arg4: memref<64x1xf32, #tpu.memory_space<vmem>>, %arg5: memref<64x1xf32, #tpu.memory_space<vmem>>, %arg6: memref<32x128xf32, #tpu.memory_space<vmem>>, %arg7: memref<1x128xf32, #tpu.memory_space<vmem>>, %arg8: memref<3x64x128xf32, #tpu.memory_space<vmem>>, %arg9: memref<3x128xf32, #tpu.memory_space<vmem>>) attributes {dimension_semantics = [#tpu.dimension_semantics<parallel>], iteration_bounds = array<i64: 1>, scalar_prefetch = 0 : i64, scratch_operands = 0 : i64, tpu.core_type = #tpu.core_type<tc>, window_params = [{pipeline_mode = #tpu.pipeline_mode<synchronous>, transform_indices = @transform_0, window_bounds = array<i64: 3, 32>}, {pipeline_mode = #tpu.pipeline_mode<synchronous>, transform_indices = @transform_1, window_bounds = array<i64: 32, 128>}, {pipeline_mode = #tpu.pipeline_mode<synchronous>, transform_indices = @transform_2, window_bounds = array<i64: 1, 128>}, {pipeline_mode = #tpu.pipeline_mode<synchronous>, transform_indices = @transform_3, window_bounds = array<i64: 64, 1>}, {pipeline_mode = #tpu.pipeline_mode<synchronous>, transform_indices = @transform_4, window_bounds = array<i64: 64, 1>}, {pipeline_mode = #tpu.pipeline_mode<synchronous>, transform_indices = @transform_5, window_bounds = array<i64: 32, 128>}, {pipeline_mode = #tpu.pipeline_mode<synchronous>, transform_indices = @transform_6, window_bounds = array<i64: 1, 128>}, {pipeline_mode = #tpu.pipeline_mode<synchronous>, transform_indices = @transform_7, window_bounds = array<i64: 3, 64, 128>}, {pipeline_mode = #tpu.pipeline_mode<synchronous>, transform_indices = @transform_8, window_bounds = array<i64: 3, 128>}]} {
    %c0 = arith.constant 0 : index
    %c0_0 = arith.constant 0 : index
    %0 = vector.load %arg1[%c0, %c0_0] : memref<3x32xf32, #tpu.memory_space<vmem>>, vector<3x32xf32>
    %c0_1 = arith.constant 0 : index
    %c0_2 = arith.constant 0 : index
    %1 = vector.load %arg2[%c0_1, %c0_2] : memref<32x128xf32, #tpu.memory_space<vmem>>, vector<32x128xf32>
    %cst = arith.constant dense<0.000000e+00> : vector<3x128xf32>
    %2 = tpu.matmul %0, %1, %cst {dimension_numbers = #tpu.dot_dimension_numbers<[1], [0], [0], [1], [0, 0, 1, 1], [], []>} : vector<3x32xf32>, vector<32x128xf32>, vector<3x128xf32> -> vector<3x128xf32>
    %c0_3 = arith.constant 0 : index
    %c0_4 = arith.constant 0 : index
    %3 = vector.load %arg3[%c0_3, %c0_4] : memref<1x128xf32, #tpu.memory_space<vmem>>, vector<1x128xf32>
    %4 = vector.broadcast %3 : vector<1x128xf32> to vector<3x128xf32>
    %5 = arith.addf %2, %4 : vector<3x128xf32>
    %cst_5 = arith.constant 0.000000e+00 : f32
    %6 = vector.broadcast %cst_5 : f32 to vector<3x128xf32>
    %7 = arith.maximumf %5, %6 : vector<3x128xf32>
    %c0_6 = arith.constant 0 : index
    %c0_7 = arith.constant 0 : index
    %8 = vector.load %arg4[%c0_6, %c0_7] : memref<64x1xf32, #tpu.memory_space<vmem>>, vector<64x1xf32>
    %c0_8 = arith.constant 0 : index
    %c0_9 = arith.constant 0 : index
    %9 = vector.load %arg5[%c0_8, %c0_9] : memref<64x1xf32, #tpu.memory_space<vmem>>, vector<64x1xf32>
    %10 = vector.extract_strided_slice %7 {offsets = [0, 0], sizes = [1, 128], strides = [1, 1]} : vector<3x128xf32> to vector<1x128xf32>
    %11 = vector.broadcast %8 : vector<64x1xf32> to vector<64x128xf32>
    %12 = vector.broadcast %10 : vector<1x128xf32> to vector<64x128xf32>
    %13 = arith.mulf %11, %12 : vector<64x128xf32>
    %14 = vector.broadcast %9 : vector<64x1xf32> to vector<64x128xf32>
    %15 = arith.addf %13, %14 : vector<64x128xf32>
    %c0_10 = arith.constant 0 : index
    %c0_11 = arith.constant 0 : index
    %c0_12 = arith.constant 0 : index
    %16 = vector.load %arg8[%c0_10, %c0_11, %c0_12] : memref<3x64x128xf32, #tpu.memory_space<vmem>>, vector<1x64x128xf32>
    %17 = vector.shape_cast %16 : vector<1x64x128xf32> to vector<64x128xf32>
    %18 = vector.shape_cast %15 : vector<64x128xf32> to vector<1x64x128xf32>
    tpu.vector_store %arg8[%c0_10, %c0_11, %c0_12], %18 {strides = array<i32>} : memref<3x64x128xf32, #tpu.memory_space<vmem>>, vector<1x64x128xf32>,
    %19 = vector.extract_strided_slice %7 {offsets = [1, 0], sizes = [1, 128], strides = [1, 1]} : vector<3x128xf32> to vector<1x128xf32>
    %20 = vector.broadcast %8 : vector<64x1xf32> to vector<64x128xf32>
    %21 = vector.broadcast %19 : vector<1x128xf32> to vector<64x128xf32>
    %22 = arith.mulf %20, %21 : vector<64x128xf32>
    %23 = vector.broadcast %9 : vector<64x1xf32> to vector<64x128xf32>
    %24 = arith.addf %22, %23 : vector<64x128xf32>
    %c1 = arith.constant 1 : index
    %c0_13 = arith.constant 0 : index
    %c0_14 = arith.constant 0 : index
    %25 = vector.load %arg8[%c1, %c0_13, %c0_14] : memref<3x64x128xf32, #tpu.memory_space<vmem>>, vector<1x64x128xf32>
    %26 = vector.shape_cast %25 : vector<1x64x128xf32> to vector<64x128xf32>
    %27 = vector.shape_cast %24 : vector<64x128xf32> to vector<1x64x128xf32>
    tpu.vector_store %arg8[%c1, %c0_13, %c0_14], %27 {strides = array<i32>} : memref<3x64x128xf32, #tpu.memory_space<vmem>>, vector<1x64x128xf32>,
    %28 = vector.extract_strided_slice %7 {offsets = [2, 0], sizes = [1, 128], strides = [1, 1]} : vector<3x128xf32> to vector<1x128xf32>
    %29 = vector.broadcast %8 : vector<64x1xf32> to vector<64x128xf32>
    %30 = vector.broadcast %28 : vector<1x128xf32> to vector<64x128xf32>
    %31 = arith.mulf %29, %30 : vector<64x128xf32>
    %32 = vector.broadcast %9 : vector<64x1xf32> to vector<64x128xf32>
    %33 = arith.addf %31, %32 : vector<64x128xf32>
    %c2 = arith.constant 2 : index
    %c0_15 = arith.constant 0 : index
    %c0_16 = arith.constant 0 : index
    %34 = vector.load %arg8[%c2, %c0_15, %c0_16] : memref<3x64x128xf32, #tpu.memory_space<vmem>>, vector<1x64x128xf32>
    %35 = vector.shape_cast %34 : vector<1x64x128xf32> to vector<64x128xf32>
    %36 = vector.shape_cast %33 : vector<64x128xf32> to vector<1x64x128xf32>
    tpu.vector_store %arg8[%c2, %c0_15, %c0_16], %36 {strides = array<i32>} : memref<3x64x128xf32, #tpu.memory_space<vmem>>, vector<1x64x128xf32>,
    %c0_17 = arith.constant 0 : index
    %c0_18 = arith.constant 0 : index
    %37 = vector.load %arg6[%c0_17, %c0_18] : memref<32x128xf32, #tpu.memory_space<vmem>>, vector<32x128xf32>
    %cst_19 = arith.constant dense<0.000000e+00> : vector<3x128xf32>
    %38 = tpu.matmul %0, %37, %cst_19 {dimension_numbers = #tpu.dot_dimension_numbers<[1], [0], [0], [1], [0, 0, 1, 1], [], []>} : vector<3x32xf32>, vector<32x128xf32>, vector<3x128xf32> -> vector<3x128xf32>
    %c0_20 = arith.constant 0 : index
    %c0_21 = arith.constant 0 : index
    %39 = vector.load %arg7[%c0_20, %c0_21] : memref<1x128xf32, #tpu.memory_space<vmem>>, vector<1x128xf32>
    %40 = vector.broadcast %39 : vector<1x128xf32> to vector<3x128xf32>
    %41 = arith.addf %38, %40 : vector<3x128xf32>
    %c0_22 = arith.constant 0 : index
    %c0_23 = arith.constant 0 : index
    %42 = vector.load %arg9[%c0_22, %c0_23] : memref<3x128xf32, #tpu.memory_space<vmem>>, vector<3x128xf32>
    tpu.vector_store %arg9[%c0_22, %c0_23], %41 {strides = array<i32>} : memref<3x128xf32, #tpu.memory_space<vmem>>, vector<3x128xf32>,
    return
  }
  func.func @transform_0(%arg0: i32) -> (i32, i32) {
    %c0_i32 = arith.constant 0 : i32
    %c0_i32_0 = arith.constant 0 : i32
    %c0_i32_1 = arith.constant 0 : i32
    return %c0_i32, %c0_i32_0 : i32, i32
  }
  func.func @transform_1(%arg0: i32) -> (i32, i32) {
    %c0_i32 = arith.constant 0 : i32
    %c0_i32_0 = arith.constant 0 : i32
    %c0_i32_1 = arith.constant 0 : i32
    return %c0_i32, %c0_i32_0 : i32, i32
  }
  func.func @transform_2(%arg0: i32) -> (i32, i32) {
    %c0_i32 = arith.constant 0 : i32
    %c0_i32_0 = arith.constant 0 : i32
    %c0_i32_1 = arith.constant 0 : i32
    return %c0_i32, %c0_i32_0 : i32, i32
  }
  func.func @transform_3(%arg0: i32) -> (i32, i32) {
    %c0_i32 = arith.constant 0 : i32
    %c0_i32_0 = arith.constant 0 : i32
    %c0_i32_1 = arith.constant 0 : i32
    return %c0_i32, %c0_i32_0 : i32, i32
  }
  func.func @transform_4(%arg0: i32) -> (i32, i32) {
    %c0_i32 = arith.constant 0 : i32
    %c0_i32_0 = arith.constant 0 : i32
    %c0_i32_1 = arith.constant 0 : i32
    return %c0_i32, %c0_i32_0 : i32, i32
  }
  func.func @transform_5(%arg0: i32) -> (i32, i32) {
    %c0_i32 = arith.constant 0 : i32
    %c0_i32_0 = arith.constant 0 : i32
    %c0_i32_1 = arith.constant 0 : i32
    return %c0_i32, %c0_i32_0 : i32, i32
  }
  func.func @transform_6(%arg0: i32) -> (i32, i32) {
    %c0_i32 = arith.constant 0 : i32
    %c0_i32_0 = arith.constant 0 : i32
    %c0_i32_1 = arith.constant 0 : i32
    return %c0_i32, %c0_i32_0 : i32, i32
  }
  func.func @transform_7(%arg0: i32) -> (i32, i32, i32) {
    %c0_i32 = arith.constant 0 : i32
    %c0_i32_0 = arith.constant 0 : i32
    %c0_i32_1 = arith.constant 0 : i32
    %c0_i32_2 = arith.constant 0 : i32
    return %c0_i32, %c0_i32_0, %c0_i32_1 : i32, i32, i32
  }
  func.func @transform_8(%arg0: i32) -> (i32, i32) {
    %c0_i32 = arith.constant 0 : i32
    %c0_i32_0 = arith.constant 0 : i32
    %c0_i32_1 = arith.constant 0 : i32
    return %c0_i32, %c0_i32_0 : i32, i32
  }
}

</mosaic_0001>

<llo_original>
// kernel: tpu_custom_call.1
$region0: #{tpu_custom_call.1}
  #allocation0 [shape = 'u32[]', space=smem, size = 0x4, offset = 0x4, fixed_abs, tag = 'smem constant byte address 0x4 - core index']
  #allocation1 [shape = 'u32[144,128]{1,0:T(1,128)}', space=vmem, size = 0x12000, scoped, tag = 'internal scratch']
  %s0 = inlined_call_operand.vmem [shape: f32[3,32], index: 0, kind: input, shape index: {}]
  %s1 = inlined_call_operand.vmem [shape: f32[32,128], index: 1, kind: input, shape index: {}]
  %s2 = inlined_call_operand.vmem [shape: f32[1,128], index: 2, kind: input, shape index: {}]
  %s3 = inlined_call_operand.vmem [shape: f32[64,1], index: 3, kind: input, shape index: {}]
  %s4 = inlined_call_operand.vmem [shape: f32[64,1], index: 4, kind: input, shape index: {}]
  %s5 = inlined_call_operand.vmem [shape: f32[32,128], index: 5, kind: input, shape index: {}]
  %s6 = inlined_call_operand.vmem [shape: f32[1,128], index: 6, kind: input, shape index: {}]
  %s7 = inlined_call_operand.hbm [shape: f32[3,64,128], index: 7, kind: output, shape index: {0}]
  %s8 = inlined_call_operand.hbm [shape: f32[3,128], index: 8, kind: output, shape index: {1}]
  %9 = xla_tuple %s7, %s8
  %s10 = sld [smem:[#allocation0]]
  $region46: #{tpu_custom_call.1} parent=0
    _
  %s12 = ssub.s32 1, %s10
  %s13 = scalar_select 0, %s12, %s10
  $region1: #{tpu_custom_call.1} parent=0
    #allocation2 [shape = 'u8[98304]{0}', space=vmem, size = 0x18000, scoped, tag = 'output window, operand 0, single buffered']
    #allocation3 [shape = 's32[1]{0}', space=sflag, size = 0x4, scoped, tag = 'scoped memory for tpu_custom_call.1']
    #allocation4 [shape = 'u8[2048]{0}', space=vmem, size = 0x800, scoped, tag = 'output window, operand 1, single buffered']
    #allocation5 [shape = 's32[1]{0}', space=sflag, size = 0x4, scoped, tag = 'scoped memory for tpu_custom_call.1']
    %14 = vsyncpa [#allocation3], 0
    %15 = vsyncpa [#allocation5], 0
    // Predicated region
    $region2: #{tpu_custom_call.1} parent=1 // pred_check
      _
    $region3: #{tpu_custom_call.1} parent=1 // pred_check_branch
      %17 = sbr.rel (0) target = $region5
    $region4: #{tpu_custom_call.1} parent=1 // pred_region
      _
    $region5: #{tpu_custom_call.1} parent=1 // pred_fallthru
      _
    // Predicated region
    $region6: #{tpu_custom_call.1} parent=1 // pred_check
      _
    $region7: #{tpu_custom_call.1} parent=1 // pred_check_branch
      %19 = sbr.rel (0) target = $region9
    $region8: #{tpu_custom_call.1} parent=1 // pred_region
      _
    $region9: #{tpu_custom_call.1} parent=1 // pred_fallthru
      _
    // Predicated region
    $region10: #{tpu_custom_call.1} parent=1 // pred_check
      _
    $region11: #{tpu_custom_call.1} parent=1 // pred_check_branch
      %21 = sbr.rel (0) target = $region13
    $region12: #{tpu_custom_call.1} parent=1 // pred_region
      _
    $region13: #{tpu_custom_call.1} parent=1 // pred_fallthru
      _
    // Predicated region
    $region14: #{tpu_custom_call.1} parent=1 // pred_check
      _
    $region15: #{tpu_custom_call.1} parent=1 // pred_check_branch
      %23 = sbr.rel (0) target = $region17
    $region16: #{tpu_custom_call.1} parent=1 // pred_region
      _
    $region17: #{tpu_custom_call.1} parent=1 // pred_fallthru
      _
    // Predicated region
    $region18: #{tpu_custom_call.1} parent=1 // pred_check
      _
    $region19: #{tpu_custom_call.1} parent=1 // pred_check_branch
      %25 = sbr.rel (0) target = $region21
    $region20: #{tpu_custom_call.1} parent=1 // pred_region
      _
    $region21: #{tpu_custom_call.1} parent=1 // pred_fallthru
      _
    // Predicated region
    $region22: #{tpu_custom_call.1} parent=1 // pred_check
      _
    $region23: #{tpu_custom_call.1} parent=1 // pred_check_branch
      %27 = sbr.rel (0) target = $region25
    $region24: #{tpu_custom_call.1} parent=1 // pred_region
      _
    $region25: #{tpu_custom_call.1} parent=1 // pred_fallthru
      _
    // Predicated region
    $region26: #{tpu_custom_call.1} parent=1 // pred_check
      _
    $region27: #{tpu_custom_call.1} parent=1 // pred_check_branch
      %29 = sbr.rel (0) target = $region29
    $region28: #{tpu_custom_call.1} parent=1 // pred_region
      _
    $region29: #{tpu_custom_call.1} parent=1 // pred_fallthru
      _
    %v30 = vld [vmem:[%s0] sm:$0x7]
    %v31 = vld [vmem:[%s1] sm:$0xff]
    %v32 = vld [vmem:[%s1 + $0x8] sm:$0xff]
    %v33 = vld [vmem:[%s1 + $0x10] sm:$0xff]
    %v34 = vld [vmem:[%s1 + $0x18] sm:$0xff]
    %v35 = vld [vmem:[%s2] sm:$0x1]
    %v37 = vlaneseq
    %v38 = vshrl.u32 %v37, 7
    %v39 = vsub.s32 0, %v38
    %v40 = vrot.slane %v35, %v39
    %vm42 = vcmask 261120
    %v44 = vsel %vm42, %v30, 0
    %46 = vmatprep.subr.mxu0 0.0
    %47 = vmatpush1.msra.mxu0 0.0
    %48 = vmatprep.subr.mxu0 0.0
    %49 = vmatpush1.msra.mxu0 0.0
    %50 = vmatprep.subr.mxu0 0.0
    %51 = vmatpush1.msra.mxu0 0.0
    %52 = vmatprep.subr.mxu0 0.0
    %53 = vmatpush1.msra.mxu0 0.0
    %54 = vmatprep.subr.mxu0 0.0
    %55 = vmatpush1.msra.mxu0 0.0
    %56 = vmatprep.subr.mxu0 0.0
    %57 = vmatpush1.msra.mxu0 0.0
    %58 = vmatprep.subr.mxu0 0.0
    %59 = vmatpush1.msra.mxu0 0.0
    %60 = vmatprep.subr.mxu0 0.0
    %61 = vmatpush1.msra.mxu0 0.0
    %62 = vmatprep.subr.mxu0 0.0
    %63 = vmatpush1.msra.mxu0 0.0
    %64 = vmatprep.subr.mxu0 0.0
    %65 = vmatpush1.msra.mxu0 0.0
    %66 = vmatprep.subr.mxu0 0.0
    %67 = vmatpush1.msra.mxu0 0.0
    %68 = vmatprep.subr.mxu0 0.0
    %69 = vmatpush1.msra.mxu0 0.0
    %70 = vmatprep.subr.mxu0 0.0
    %71 = vmatpush1.msra.mxu0 %v34
    %72 = vmatprep.subr.mxu0 0.0
    %73 = vmatpush1.msra.mxu0 %v33
    %74 = vmatprep.subr.mxu0 0.0
    %75 = vmatpush1.msra.mxu0 %v32
    %76 = vmatprep.subr.mxu0 0.0
    %77 = vmatpush1.msra.mxu0 %v31
    %78 = vmatprep.subr.mxu0 0.0
    %79 = vmatpush2.msra.mxu0 0.0
    %80 = vmatprep.subr.mxu0 0.0
    %81 = vmatpush2.msra.mxu0 0.0
    %82 = vmatprep.subr.mxu0 0.0
    %83 = vmatpush2.msra.mxu0 0.0
    %84 = vmatprep.subr.mxu0 0.0
    %85 = vmatpush2.msra.mxu0 0.0
    %86 = vmatprep.subr.mxu0 0.0
    %87 = vmatpush2.msra.mxu0 0.0
    %88 = vmatprep.subr.mxu0 0.0
    %89 = vmatpush2.msra.mxu0 0.0
    %90 = vmatprep.subr.mxu0 0.0
    %91 = vmatpush2.msra.mxu0 0.0
    %92 = vmatprep.subr.mxu0 0.0
    %93 = vmatpush2.msra.mxu0 0.0
    %94 = vmatprep.subr.mxu0 0.0
    %95 = vmatpush2.msra.mxu0 0.0
    %96 = vmatprep.subr.mxu0 0.0
    %97 = vmatpush2.msra.mxu0 0.0
    %98 = vmatprep.subr.mxu0 0.0
    %99 = vmatpush2.msra.mxu0 0.0
    %100 = vmatprep.subr.mxu0 0.0
    %101 = vmatpush2.msra.mxu0 0.0
    %102 = vmatprep.subr.mxu0 0.0
    %103 = vmatpush2.msra.mxu0 0.0
    %104 = vmatprep.subr.mxu0 0.0
    %105 = vmatpush2.msra.mxu0 0.0
    %106 = vmatprep.subr.mxu0 0.0
    %107 = vmatpush2.msra.mxu0 0.0
    %108 = vmatprep.subr.mxu0 0.0
    %109 = vmatpush2.msra.mxu0 0.0
    %110 = vmatprep.mubr.f32.mxu0 0.0
    %111 = vmatmul.mubr.f32.gmra.mxu0 %v44
    %v112 = vpop.f32.mrf.mxu0
    %v113 = vadd.f32 %v40, %v112
    %v114 = vpop.f32.mrf.mxu0
    %115 = vdwg.mxu0
    %v116 = vmax.f32 %v113, 0.0
    %v117 = vld [vmem:[%s3] sm:$0xff]
    %v118 = vld [vmem:[%s3 + $0x8] sm:$0xff]
    %v119 = vld [vmem:[%s3 + $0x10] sm:$0xff]
    %v120 = vld [vmem:[%s3 + $0x18] sm:$0xff]
    %v121 = vld [vmem:[%s3 + $0x20] sm:$0xff]
    %v122 = vld [vmem:[%s3 + $0x28] sm:$0xff]
    %v123 = vld [vmem:[%s3 + $0x30] sm:$0xff]
    %v124 = vld [vmem:[%s3 + $0x38] sm:$0xff]
    %v125 = vld [vmem:[%s4] sm:$0xff]
    %v126 = vld [vmem:[%s4 + $0x8] sm:$0xff]
    %v127 = vld [vmem:[%s4 + $0x10] sm:$0xff]
    %v128 = vld [vmem:[%s4 + $0x18] sm:$0xff]
    %v129 = vld [vmem:[%s4 + $0x20] sm:$0xff]
    %v130 = vld [vmem:[%s4 + $0x28] sm:$0xff]
    %v131 = vld [vmem:[%s4 + $0x30] sm:$0xff]
    %v132 = vld [vmem:[%s4 + $0x38] sm:$0xff]
    %134 = vset.pattern.permute.xlu0 0
    %135 = vperm.xlu0 %134, %v117
    %v136 = vpop.permute.xlu0 %135
    %139 = vset.pattern.permute.xlu0 0
    %140 = vperm.xlu0 %139, %v118
    %v141 = vpop.permute.xlu0 %140
    %144 = vset.pattern.permute.xlu0 0
    %145 = vperm.xlu0 %144, %v119
    %v146 = vpop.permute.xlu0 %145
    %149 = vset.pattern.permute.xlu0 0
    %150 = vperm.xlu0 %149, %v120
    %v151 = vpop.permute.xlu0 %150
    %154 = vset.pattern.permute.xlu0 0
    %155 = vperm.xlu0 %154, %v121
    %v156 = vpop.permute.xlu0 %155
    %159 = vset.pattern.permute.xlu0 0
    %160 = vperm.xlu0 %159, %v122
    %v161 = vpop.permute.xlu0 %160
    %164 = vset.pattern.permute.xlu0 0
    %165 = vperm.xlu0 %164, %v123
    %v166 = vpop.permute.xlu0 %165
    %169 = vset.pattern.permute.xlu0 0
    %170 = vperm.xlu0 %169, %v124
    %v171 = vpop.permute.xlu0 %170
    %v173 = vlaneseq
    %v174 = vshrl.u32 %v173, 7
    %v175 = vsub.s32 0, %v174
    %v176 = vrot.slane %v116, %v175
    %v177 = vmul.f32 %v136, %v176
    %v178 = vmul.f32 %v141, %v176
    %v179 = vmul.f32 %v146, %v176
    %v180 = vmul.f32 %v151, %v176
    %v181 = vmul.f32 %v156, %v176
    %v182 = vmul.f32 %v161, %v176
    %v183 = vmul.f32 %v166, %v176
    %v184 = vmul.f32 %v171, %v176
    %186 = vset.pattern.permute.xlu0 0
    %187 = vperm.xlu0 %186, %v125
    %v188 = vpop.permute.xlu0 %187
    %191 = vset.pattern.permute.xlu0 0
    %192 = vperm.xlu0 %191, %v126
    %v193 = vpop.permute.xlu0 %192
    %196 = vset.pattern.permute.xlu0 0
    %197 = vperm.xlu0 %196, %v127
    %v198 = vpop.permute.xlu0 %197
    %201 = vset.pattern.permute.xlu0 0
    %202 = vperm.xlu0 %201, %v128
    %v203 = vpop.permute.xlu0 %202
    %206 = vset.pattern.permute.xlu0 0
    %207 = vperm.xlu0 %206, %v129
    %v208 = vpop.permute.xlu0 %207
    %211 = vset.pattern.permute.xlu0 0
    %212 = vperm.xlu0 %211, %v130
    %v213 = vpop.permute.xlu0 %212
    %216 = vset.pattern.permute.xlu0 0
    %217 = vperm.xlu0 %216, %v131
    %v218 = vpop.permute.xlu0 %217
    %221 = vset.pattern.permute.xlu0 0
    %222 = vperm.xlu0 %221, %v132
    %v223 = vpop.permute.xlu0 %222
    %v225 = vadd.f32 %v177, %v188
    %v226 = vadd.f32 %v178, %v193
    %v227 = vadd.f32 %v179, %v198
    %v228 = vadd.f32 %v180, %v203
    %v229 = vadd.f32 %v181, %v208
    %v230 = vadd.f32 %v182, %v213
    %v231 = vadd.f32 %v183, %v218
    %v232 = vadd.f32 %v184, %v223
    %233 = vst [vmem:[#allocation2] sm:$0xff] %v225
    %234 = vst [vmem:[#allocation2 + $0x8] sm:$0xff] %v226
    %235 = vst [vmem:[#allocation2 + $0x10] sm:$0xff] %v227
    %236 = vst [vmem:[#allocation2 + $0x18] sm:$0xff] %v228
    %237 = vst [vmem:[#allocation2 + $0x20] sm:$0xff] %v229
    %238 = vst [vmem:[#allocation2 + $0x28] sm:$0xff] %v230
    %239 = vst [vmem:[#allocation2 + $0x30] sm:$0xff] %v231
    %240 = vst [vmem:[#allocation2 + $0x38] sm:$0xff] %v232
    %v241 = vlaneseq
    %v242 = vshrl.u32 %v241, 7
    %v243 = vsub.s32 1, %v242
    %v244 = vrot.slane %v116, %v243
    %v245 = vmul.f32 %v136, %v244
    %v246 = vmul.f32 %v141, %v244
    %v247 = vmul.f32 %v146, %v244
    %v248 = vmul.f32 %v151, %v244
    %v249 = vmul.f32 %v156, %v244
    %v250 = vmul.f32 %v161, %v244
    %v251 = vmul.f32 %v166, %v244
    %v252 = vmul.f32 %v171, %v244
    %v253 = vadd.f32 %v245, %v188
    %v254 = vadd.f32 %v246, %v193
    %v255 = vadd.f32 %v247, %v198
    %v256 = vadd.f32 %v248, %v203
    %v257 = vadd.f32 %v249, %v208
    %v258 = vadd.f32 %v250, %v213
    %v259 = vadd.f32 %v251, %v218
    %v260 = vadd.f32 %v252, %v223
    %s261 = scalar_lea.vmem [#allocation2], 64
    %262 = vst [vmem:[%s261] sm:$0xff] %v253
    %263 = vst [vmem:[%s261 + $0x8] sm:$0xff] %v254
    %264 = vst [vmem:[%s261 + $0x10] sm:$0xff] %v255
    %265 = vst [vmem:[%s261 + $0x18] sm:$0xff] %v256
    %266 = vst [vmem:[%s261 + $0x20] sm:$0xff] %v257
    %267 = vst [vmem:[%s261 + $0x28] sm:$0xff] %v258
    %268 = vst [vmem:[%s261 + $0x30] sm:$0xff] %v259
    %269 = vst [vmem:[%s261 + $0x38] sm:$0xff] %v260
    %v270 = vlaneseq
    %v271 = vshrl.u32 %v270, 7
    %v272 = vsub.s32 2, %v271
    %v273 = vrot.slane %v116, %v272
    %v274 = vmul.f32 %v136, %v273
    %v275 = vmul.f32 %v141, %v273
    %v276 = vmul.f32 %v146, %v273
    %v277 = vmul.f32 %v151, %v273
    %v278 = vmul.f32 %v156, %v273
    %v279 = vmul.f32 %v161, %v273
    %v280 = vmul.f32 %v166, %v273
    %v281 = vmul.f32 %v171, %v273
    %v282 = vadd.f32 %v274, %v188
    %v283 = vadd.f32 %v275, %v193
    %v284 = vadd.f32 %v276, %v198
    %v285 = vadd.f32 %v277, %v203
    %v286 = vadd.f32 %v278, %v208
    %v287 = vadd.f32 %v279, %v213
    %v288 = vadd.f32 %v280, %v218
    %v289 = vadd.f32 %v281, %v223
    %s290 = scalar_lea.vmem [#allocation2], 128
    %291 = vst [vmem:[%s290] sm:$0xff] %v282
    %292 = vst [vmem:[%s290 + $0x8] sm:$0xff] %v283
    %293 = vst [vmem:[%s290 + $0x10] sm:$0xff] %v284
    %294 = vst [vmem:[%s290 + $0x18] sm:$0xff] %v285
    %295 = vst [vmem:[%s290 + $0x20] sm:$0xff] %v286
    %296 = vst [vmem:[%s290 + $0x28] sm:$0xff] %v287
    %297 = vst [vmem:[%s290 + $0x30] sm:$0xff] %v288
    %298 = vst [vmem:[%s290 + $0x38] sm:$0xff] %v289
    %v299 = vld [vmem:[%s5] sm:$0xff]
    %v300 = vld [vmem:[%s5 + $0x8] sm:$0xff]
    %v301 = vld [vmem:[%s5 + $0x10] sm:$0xff]
    %v302 = vld [vmem:[%s5 + $0x18] sm:$0xff]
    %v303 = vld [vmem:[%s6] sm:$0x1]
    %v305 = vlaneseq
    %v306 = vshrl.u32 %v305, 7
    %v307 = vsub.s32 0, %v306
    %v308 = vrot.slane %v303, %v307
    %310 = vmatprep.subr.mxu0 0.0
    %311 = vmatpush1.msra.mxu0 0.0
    %312 = vmatprep.subr.mxu0 0.0
    %313 = vmatpush1.msra.mxu0 0.0
    %314 = vmatprep.subr.mxu0 0.0
    %315 = vmatpush1.msra.mxu0 0.0
    %316 = vmatprep.subr.mxu0 0.0
    %317 = vmatpush1.msra.mxu0 0.0
    %318 = vmatprep.subr.mxu0 0.0
    %319 = vmatpush1.msra.mxu0 0.0
    %320 = vmatprep.subr.mxu0 0.0
    %321 = vmatpush1.msra.mxu0 0.0
    %322 = vmatprep.subr.mxu0 0.0
    %323 = vmatpush1.msra.mxu0 0.0
    %324 = vmatprep.subr.mxu0 0.0
    %325 = vmatpush1.msra.mxu0 0.0
    %326 = vmatprep.subr.mxu0 0.0
    %327 = vmatpush1.msra.mxu0 0.0
    %328 = vmatprep.subr.mxu0 0.0
    %329 = vmatpush1.msra.mxu0 0.0
    %330 = vmatprep.subr.mxu0 0.0
    %331 = vmatpush1.msra.mxu0 0.0
    %332 = vmatprep.subr.mxu0 0.0
    %333 = vmatpush1.msra.mxu0 0.0
    %334 = vmatprep.subr.mxu0 0.0
    %335 = vmatpush1.msra.mxu0 %v302
    %336 = vmatprep.subr.mxu0 0.0
    %337 = vmatpush1.msra.mxu0 %v301
    %338 = vmatprep.subr.mxu0 0.0
    %339 = vmatpush1.msra.mxu0 %v300
    %340 = vmatprep.subr.mxu0 0.0
    %341 = vmatpush1.msra.mxu0 %v299
    %342 = vmatprep.subr.mxu0 0.0
    %343 = vmatpush2.msra.mxu0 0.0
    %344 = vmatprep.subr.mxu0 0.0
    %345 = vmatpush2.msra.mxu0 0.0
    %346 = vmatprep.subr.mxu0 0.0
    %347 = vmatpush2.msra.mxu0 0.0
    %348 = vmatprep.subr.mxu0 0.0
    %349 = vmatpush2.msra.mxu0 0.0
    %350 = vmatprep.subr.mxu0 0.0
    %351 = vmatpush2.msra.mxu0 0.0
    %352 = vmatprep.subr.mxu0 0.0
    %353 = vmatpush2.msra.mxu0 0.0
    %354 = vmatprep.subr.mxu0 0.0
    %355 = vmatpush2.msra.mxu0 0.0
    %356 = vmatprep.subr.mxu0 0.0
    %357 = vmatpush2.msra.mxu0 0.0
    %358 = vmatprep.subr.mxu0 0.0
    %359 = vmatpush2.msra.mxu0 0.0
    %360 = vmatprep.subr.mxu0 0.0
    %361 = vmatpush2.msra.mxu0 0.0
    %362 = vmatprep.subr.mxu0 0.0
    %363 = vmatpush2.msra.mxu0 0.0
    %364 = vmatprep.subr.mxu0 0.0
    %365 = vmatpush2.msra.mxu0 0.0
    %366 = vmatprep.subr.mxu0 0.0
    %367 = vmatpush2.msra.mxu0 0.0
    %368 = vmatprep.subr.mxu0 0.0
    %369 = vmatpush2.msra.mxu0 0.0
    %370 = vmatprep.subr.mxu0 0.0
    %371 = vmatpush2.msra.mxu0 0.0
    %372 = vmatprep.subr.mxu0 0.0
    %373 = vmatpush2.msra.mxu0 0.0
    %374 = vmatprep.mubr.f32.mxu0 0.0
    %375 = vmatmul.mubr.f32.gmra.mxu0 %v44
    %v376 = vpop.f32.mrf.mxu0
    %v377 = vadd.f32 %v308, %v376
    %v378 = vpop.f32.mrf.mxu0
    %379 = vdwg.mxu0
    %380 = vst [vmem:[#allocation4] sm:$0x7] %v377
    // Predicated region
    $region30: #{tpu_custom_call.1} parent=1 // pred_check
      _
    $region31: #{tpu_custom_call.1} parent=1 // pred_check_branch
      %382 = sbr.rel (0) target = $region33
    $region32: #{tpu_custom_call.1} parent=1 // pred_region
      %s384 = ssub.s32 3072, 3072
      %385 = vsyncadd [#allocation3], %s384
      %s386 = sshll.u32 [#allocation2], 4
      %s387 = int_to_ptr.vmem [resolvable:$true] %s386
      %392 = dma.vmem_to_hbm [thread:$0]  %s387, 3072, %s7, [#allocation3], 128, 128, 8
    $region33: #{tpu_custom_call.1} parent=1 // pred_fallthru
      _
    // Predicated region
    $region34: #{tpu_custom_call.1} parent=1 // pred_check
      _
    $region35: #{tpu_custom_call.1} parent=1 // pred_check_branch
      %394 = sbr.rel (0) target = $region37
    $region36: #{tpu_custom_call.1} parent=1 // pred_region
      %s396 = ssub.s32 64, 64
      %397 = vsyncadd [#allocation5], %s396
      %s399 = sshll.u32 [#allocation4], 4
      %s400 = int_to_ptr.vmem [resolvable:$true] %s399
      %402 = dma.vmem_to_hbm [thread:$0]  %s400, 64, %s8, [#allocation5]
    $region37: #{tpu_custom_call.1} parent=1 // pred_fallthru
      _
    // Predicated region
    $region38: #{tpu_custom_call.1} parent=1 // pred_check
      _
    $region39: #{tpu_custom_call.1} parent=1 // pred_check_branch
      %404 = sbr.rel (0) target = $region41
    $region40: #{tpu_custom_call.1} parent=1 // pred_region
      %405 = dma.done [#allocation3], 3072
    $region41: #{tpu_custom_call.1} parent=1 // pred_fallthru
      _
    // Predicated region
    $region42: #{tpu_custom_call.1} parent=1 // pred_check
      _
    $region43: #{tpu_custom_call.1} parent=1 // pred_check_branch
      %407 = sbr.rel (0) target = $region45
    $region44: #{tpu_custom_call.1} parent=1 // pred_region
      %408 = dma.done [#allocation5], 64
    $region45: #{tpu_custom_call.1} parent=1 // pred_fallthru
      _
    %409 = vsyncpa [#allocation3], 1
    %410 = vsyncpa [#allocation5], 1

</llo_original>
